<compile_context>
chip_gen: v6e
topology: v6e:2x2x1
jax: 0.10.0
libtpu: 0.0.40
codegen_flags: <defaults>
</compile_context>

<pallas_src>
import functools

import jax
import jax.numpy as jnp
from jax.experimental import pallas as pl
from jax.experimental.pallas import tpu as pltpu


def _round_up(n, m):
    return ((n + m - 1) // m) * m


def _cdiv(a, b):
    return (a + b - 1) // b


def _disc_kernel(x_ref, w1_ref, b1_ref, w2_ref, b2_ref, w3_ref, b3_ref, o_ref):
    # One batch tile + all weights resident in VMEM; three MXU matmuls (bf16
    # operands, f32 accumulation) fused with f32 bias-add + ReLU on the VPU.
    x = x_ref[...].astype(jnp.bfloat16)                          # (tb, D)

    h1 = jnp.dot(x, w1_ref[...], preferred_element_type=jnp.float32) + b1_ref[...]
    h1 = jnp.maximum(h1, 0.0).astype(jnp.bfloat16)               # (tb, 512)

    h2 = jnp.dot(h1, w2_ref[...], preferred_element_type=jnp.float32) + b2_ref[...]
    h2 = jnp.maximum(h2, 0.0).astype(jnp.bfloat16)               # (tb, 256)

    out = jnp.dot(h2, w3_ref[...], preferred_element_type=jnp.float32) + b3_ref[...]
    # Columns 1..127 are exactly zero (zero-padded W3/b3); store only the real one.
    o_ref[...] = out[:, 0:1].astype(o_ref.dtype)                 # (tb, 1)


@functools.partial(jax.jit, static_argnames=("block_b",))
def discriminator_forward(x, prep, *, block_b=1024):
    """x: (B, input_dim).  prep: output of prepare_discriminator_params()."""
    B, D = x.shape
    H1 = prep["w1"].shape[1]      # 512
    H2 = prep["w2"].shape[1]      # 256
    O_PAD = prep["w3"].shape[1]   # 128 (zero-padded from 1)

    block_b = max(8, _round_up(block_b, 8))

    # Batch tile: multiple of 8 sublanes, capped at block_b; no padding of x --
    # the tail tile relies on OOB-masked reads/stores.
    tb = min(block_b, _round_up(B, 8))
    if B <= block_b and B >= 256:
        # A single tile would idle one v7x TensorCore; split into two tiles.
        tb = _round_up(_cdiv(B, 2), 8)
    grid_b = _cdiv(B, tb)

    # VMEM budget (double-buffered blocks + live intermediates), capped at the
    # v7x per-TC capacity.
    D_pad = _round_up(D, 128)
    est = 2 * tb * D_pad * x.dtype.itemsize                        # x tile
    est += 2 * 2 * (_round_up(D, 8) * H1 + H1 * H2 + H2 * O_PAD)   # bf16 weights
    est += 2 * 4 * 8 * (H1 + H2 + O_PAD)                           # f32 biases (padded)
    est += 2 * tb * 128 * 4                                        # out tile (lane-padded)
    est += tb * (H1 + H2 + O_PAD) * 4 + tb * (H1 + H2) * 2         # h1/h2/out temporaries
    vmem_limit = int(min(max(32 * 1024 * 1024, est * 3 // 2), 64 * 1024 * 1024))

    flops = 2 * B * (D * H1 + H1 * H2 + H2 * O_PAD)
    bytes_accessed = (
        B * D * x.dtype.itemsize                    # x read (original dtype)
        + (D * H1 + H1 * H2 + H2 * O_PAD) * 2       # bf16 weights
        + (H1 + H2 + O_PAD) * 4                     # f32 biases
        + B * 4                                     # output (B, 1) f32
    )

    in_specs = [
        pl.BlockSpec((tb, D), lambda i: (i, 0)),    # x tiled over batch
        pl.BlockSpec((D, H1), lambda i: (0, 0)),    # weights: constant block, stays resident
        pl.BlockSpec((1, H1), lambda i: (0, 0)),
        pl.BlockSpec((H1, H2), lambda i: (0, 0)),
        pl.BlockSpec((1, H2), lambda i: (0, 0)),
        pl.BlockSpec((H2, O_PAD), lambda i: (0, 0)),
        pl.BlockSpec((1, O_PAD), lambda i: (0, 0)),
    ]
    out_spec = pl.BlockSpec((tb, 1), lambda i: (i, 0))

    return pl.pallas_call(
        _disc_kernel,
        out_shape=jax.ShapeDtypeStruct((B, 1), jnp.float32),
        grid=(grid_b,),
        in_specs=in_specs,
        out_specs=out_spec,
        compiler_params=pltpu.CompilerParams(
            dimension_semantics=("parallel",),
            vmem_limit_bytes=vmem_limit,
        ),
        cost_estimate=pl.CostEstimate(
            flops=flops, transcendentals=0, bytes_accessed=bytes_accessed),
    )(x, prep["w1"], prep["b1"], prep["w2"], prep["b2"], prep["w3"], prep["b3"])


def init_discriminator_params(key, input_dim):
    """Deterministic init mimicking nn.Linear's U(-1/sqrt(fan_in), 1/sqrt(fan_in)).

    Weights stored as (in_features, out_features) -- transpose of PyTorch layout.
    """
    dims = [(input_dim, 512), (512, 256), (256, 1)]
    params = {}
    for idx, (fan_in, fan_out) in enumerate(dims, start=1):
        key, kw, kb = jax.random.split(key, 3)
        bound = 1.0 / jnp.sqrt(float(fan_in))
        params[f"w{idx}"] = jax.random.uniform(
            kw, (fan_in, fan_out), jnp.float32, minval=-bound, maxval=bound)
        params[f"b{idx}"] = jax.random.uniform(
            kb, (1, fan_out), jnp.float32, minval=-bound, maxval=bound)
    return params


def prepare_discriminator_params(params, out_pad=128):
    """One-time kernel-side prep: bf16 matmul operands, W3/b3 zero-padded to
    `out_pad` output columns (padded columns stay exactly zero)."""
    o = params["w3"].shape[1]
    return {
        "w1": params["w1"].astype(jnp.bfloat16),
        "b1": params["b1"].astype(jnp.float32),
        "w2": params["w2"].astype(jnp.bfloat16),
        "b2": params["b2"].astype(jnp.float32),
        "w3": jnp.pad(params["w3"], ((0, 0), (0, out_pad - o))).astype(jnp.bfloat16),
        "b3": jnp.pad(params["b3"].astype(jnp.float32), ((0, 0), (0, out_pad - o))),
    }


def _reference_forward(x, p):
    h1 = jnp.maximum(x @ p["w1"] + p["b1"], 0.0)
    h2 = jnp.maximum(h1 @ p["w2"] + p["b2"], 0.0)
    return h2 @ p["w3"] + p["b3"]


if __name__ == "__main__":
    key = jax.random.PRNGKey(0)
    k_params, k_x, k_x2 = jax.random.split(key, 3)

    batch, input_dim = 24, 32
    raw = init_discriminator_params(k_params, input_dim)
    prep = prepare_discriminator_params(raw)

    # Small batch: single grid step, tb = 24.
    x = jax.random.normal(k_x, (batch, input_dim), jnp.float32)
    ref = _reference_forward(x, raw)
    out = jax.block_until_ready(discriminator_forward(x, prep))
    assert out.shape == (batch, 1)
    # bf16 matmul operands => loosen tolerance vs the f32 reference.
    assert jnp.allclose(out, ref, atol=5e-2, rtol=5e-2), "mismatch vs reference"

    # Larger batch: exercises the 2-way megacore split (grid=2, masked tail)
    # and the explicit multi-step grid path (block_b=128 -> grid=3).
    batch2 = 300
    x2 = jax.random.normal(k_x2, (batch2, input_dim), jnp.float32)
    ref2 = _reference_forward(x2, raw)
    out2 = jax.block_until_ready(discriminator_forward(x2, prep))
    out2b = jax.block_until_ready(discriminator_forward(x2, prep, block_b=128))
    assert out2.shape == (batch2, 1) and out2b.shape == (batch2, 1)
    assert jnp.allclose(out2, ref2, atol=5e-2, rtol=5e-2), "split-tile mismatch"
    assert jnp.allclose(out2b, ref2, atol=5e-2, rtol=5e-2), "tiled mismatch"

    print("KERNEL_OK")
</pallas_src>

<mosaic_0001>
module attributes {stable_mosaic.version = 11 : i64} {
  func.func @_disc_kernel(%arg0: i32, %arg1: memref<24x32xf32, #tpu.memory_space<vmem>>, %arg2: memref<32x512xbf16, #tpu.memory_space<vmem>>, %arg3: memref<1x512xf32, #tpu.memory_space<vmem>>, %arg4: memref<512x256xbf16, #tpu.memory_space<vmem>>, %arg5: memref<1x256xf32, #tpu.memory_space<vmem>>, %arg6: memref<256x128xbf16, #tpu.memory_space<vmem>>, %arg7: memref<1x128xf32, #tpu.memory_space<vmem>>, %arg8: memref<24x1xf32, #tpu.memory_space<vmem>>) attributes {dimension_semantics = [#tpu.dimension_semantics<parallel>], iteration_bounds = array<i64: 1>, scalar_prefetch = 0 : i64, scratch_operands = 0 : i64, tpu.core_type = #tpu.core_type<tc>, window_params = [{transform_indices = @transform_0, window_bounds = array<i64: 24, 32>}, {pipeline_mode = #tpu.pipeline_mode<synchronous>, transform_indices = @transform_1, window_bounds = array<i64: 32, 512>}, {pipeline_mode = #tpu.pipeline_mode<synchronous>, transform_indices = @transform_2, window_bounds = array<i64: 1, 512>}, {pipeline_mode = #tpu.pipeline_mode<synchronous>, transform_indices = @transform_3, window_bounds = array<i64: 512, 256>}, {pipeline_mode = #tpu.pipeline_mode<synchronous>, transform_indices = @transform_4, window_bounds = array<i64: 1, 256>}, {pipeline_mode = #tpu.pipeline_mode<synchronous>, transform_indices = @transform_5, window_bounds = array<i64: 256, 128>}, {pipeline_mode = #tpu.pipeline_mode<synchronous>, transform_indices = @transform_6, window_bounds = array<i64: 1, 128>}, {transform_indices = @transform_7, window_bounds = array<i64: 24, 1>}]} {
    %c0 = arith.constant 0 : index
    %c0_0 = arith.constant 0 : index
    %0 = vector.load %arg1[%c0, %c0_0] : memref<24x32xf32, #tpu.memory_space<vmem>>, vector<24x32xf32>
    %1 = arith.truncf %0 : vector<24x32xf32> to vector<24x32xbf16>
    %c0_1 = arith.constant 0 : index
    %c0_2 = arith.constant 0 : index
    %2 = vector.load %arg2[%c0_1, %c0_2] : memref<32x512xbf16, #tpu.memory_space<vmem>>, vector<32x512xbf16>
    %cst = arith.constant dense<0.000000e+00> : vector<24x512xf32>
    %3 = tpu.matmul %1, %2, %cst {dimension_numbers = #tpu.dot_dimension_numbers<[1], [0], [0], [1], [0, 0, 1, 1], [], []>} : vector<24x32xbf16>, vector<32x512xbf16>, vector<24x512xf32> -> vector<24x512xf32>
    %c0_3 = arith.constant 0 : index
    %c0_4 = arith.constant 0 : index
    %4 = vector.load %arg3[%c0_3, %c0_4] : memref<1x512xf32, #tpu.memory_space<vmem>>, vector<1x512xf32>
    %5 = vector.broadcast %4 : vector<1x512xf32> to vector<24x512xf32>
    %6 = arith.addf %3, %5 : vector<24x512xf32>
    %cst_5 = arith.constant 0.000000e+00 : f32
    %7 = vector.broadcast %cst_5 : f32 to vector<24x512xf32>
    %8 = arith.maximumf %6, %7 : vector<24x512xf32>
    %9 = arith.truncf %8 : vector<24x512xf32> to vector<24x512xbf16>
    %c0_6 = arith.constant 0 : index
    %c0_7 = arith.constant 0 : index
    %10 = vector.load %arg4[%c0_6, %c0_7] : memref<512x256xbf16, #tpu.memory_space<vmem>>, vector<512x256xbf16>
    %cst_8 = arith.constant dense<0.000000e+00> : vector<24x256xf32>
    %11 = tpu.matmul %9, %10, %cst_8 {dimension_numbers = #tpu.dot_dimension_numbers<[1], [0], [0], [1], [0, 0, 1, 1], [], []>} : vector<24x512xbf16>, vector<512x256xbf16>, vector<24x256xf32> -> vector<24x256xf32>
    %c0_9 = arith.constant 0 : index
    %c0_10 = arith.constant 0 : index
    %12 = vector.load %arg5[%c0_9, %c0_10] : memref<1x256xf32, #tpu.memory_space<vmem>>, vector<1x256xf32>
    %13 = vector.broadcast %12 : vector<1x256xf32> to vector<24x256xf32>
    %14 = arith.addf %11, %13 : vector<24x256xf32>
    %cst_11 = arith.constant 0.000000e+00 : f32
    %15 = vector.broadcast %cst_11 : f32 to vector<24x256xf32>
    %16 = arith.maximumf %14, %15 : vector<24x256xf32>
    %17 = arith.truncf %16 : vector<24x256xf32> to vector<24x256xbf16>
    %c0_12 = arith.constant 0 : index
    %c0_13 = arith.constant 0 : index
    %18 = vector.load %arg6[%c0_12, %c0_13] : memref<256x128xbf16, #tpu.memory_space<vmem>>, vector<256x128xbf16>
    %cst_14 = arith.constant dense<0.000000e+00> : vector<24x128xf32>
    %19 = tpu.matmul %17, %18, %cst_14 {dimension_numbers = #tpu.dot_dimension_numbers<[1], [0], [0], [1], [0, 0, 1, 1], [], []>} : vector<24x256xbf16>, vector<256x128xbf16>, vector<24x128xf32> -> vector<24x128xf32>
    %c0_15 = arith.constant 0 : index
    %c0_16 = arith.constant 0 : index
    %20 = vector.load %arg7[%c0_15, %c0_16] : memref<1x128xf32, #tpu.memory_space<vmem>>, vector<1x128xf32>
    %21 = vector.broadcast %20 : vector<1x128xf32> to vector<24x128xf32>
    %22 = arith.addf %19, %21 : vector<24x128xf32>
    %23 = vector.extract_strided_slice %22 {offsets = [0, 0], sizes = [24, 1], strides = [1, 1]} : vector<24x128xf32> to vector<24x1xf32>
    %c0_17 = arith.constant 0 : index
    %c0_18 = arith.constant 0 : index
    %24 = vector.load %arg8[%c0_17, %c0_18] : memref<24x1xf32, #tpu.memory_space<vmem>>, vector<24x1xf32>
    tpu.vector_store %arg8[%c0_17, %c0_18], %23 {strides = array<i32>} : memref<24x1xf32, #tpu.memory_space<vmem>>, vector<24x1xf32>,
    return
  }
  func.func @transform_0(%arg0: i32) -> (i32, i32) {
    %c0_i32 = arith.constant 0 : i32
    %c0_i32_0 = arith.constant 0 : i32
    return %arg0, %c0_i32 : i32, i32
  }
  func.func @transform_1(%arg0: i32) -> (i32, i32) {
    %c0_i32 = arith.constant 0 : i32
    %c0_i32_0 = arith.constant 0 : i32
    %c0_i32_1 = arith.constant 0 : i32
    return %c0_i32, %c0_i32_0 : i32, i32
  }
  func.func @transform_2(%arg0: i32) -> (i32, i32) {
    %c0_i32 = arith.constant 0 : i32
    %c0_i32_0 = arith.constant 0 : i32
    %c0_i32_1 = arith.constant 0 : i32
    return %c0_i32, %c0_i32_0 : i32, i32
  }
  func.func @transform_3(%arg0: i32) -> (i32, i32) {
    %c0_i32 = arith.constant 0 : i32
    %c0_i32_0 = arith.constant 0 : i32
    %c0_i32_1 = arith.constant 0 : i32
    return %c0_i32, %c0_i32_0 : i32, i32
  }
  func.func @transform_4(%arg0: i32) -> (i32, i32) {
    %c0_i32 = arith.constant 0 : i32
    %c0_i32_0 = arith.constant 0 : i32
    %c0_i32_1 = arith.constant 0 : i32
    return %c0_i32, %c0_i32_0 : i32, i32
  }
  func.func @transform_5(%arg0: i32) -> (i32, i32) {
    %c0_i32 = arith.constant 0 : i32
    %c0_i32_0 = arith.constant 0 : i32
    %c0_i32_1 = arith.constant 0 : i32
    return %c0_i32, %c0_i32_0 : i32, i32
  }
  func.func @transform_6(%arg0: i32) -> (i32, i32) {
    %c0_i32 = arith.constant 0 : i32
    %c0_i32_0 = arith.constant 0 : i32
    %c0_i32_1 = arith.constant 0 : i32
    return %c0_i32, %c0_i32_0 : i32, i32
  }
  func.func @transform_7(%arg0: i32) -> (i32, i32) {
    %c0_i32 = arith.constant 0 : i32
    %c0_i32_0 = arith.constant 0 : i32
    return %arg0, %c0_i32 : i32, i32
  }
}

</mosaic_0001>

<llo_original>
// kernel: discriminator_forward.1
$region0: #{discriminator_forward.1}
  #allocation0 [shape = 'u32[]', space=smem, size = 0x4, offset = 0x4, fixed_abs, tag = 'smem constant byte address 0x4 - core index']
  #allocation1 [shape = 'u32[144,128]{1,0:T(1,128)}', space=vmem, size = 0x12000, scoped, tag = 'internal scratch']
  %s0 = inlined_call_operand.hbm [shape: f32[24,32], index: 0, kind: input, shape index: {}]
  %s1 = inlined_call_operand.hbm [shape: bf16[32,512], index: 1, kind: input, shape index: {}]
  %s2 = inlined_call_operand.hbm [shape: f32[1,512], index: 2, kind: input, shape index: {}]
  %s3 = inlined_call_operand.hbm [shape: bf16[512,256], index: 3, kind: input, shape index: {}]
  %s4 = inlined_call_operand.vmem [shape: f32[1,256], index: 4, kind: input, shape index: {}]
  %s5 = inlined_call_operand.hbm [shape: bf16[256,128], index: 5, kind: input, shape index: {}]
  %s6 = inlined_call_operand.vmem [shape: f32[1,128], index: 6, kind: input, shape index: {}]
  %s7 = inlined_call_operand.vmem [shape: f32[24,1], index: 7, kind: output, shape index: {}]
  %s8 = sld [smem:[#allocation0]]
  $region58: #{discriminator_forward.1} parent=0
    _
  %s10 = ssub.s32 1, %s8
  %s11 = scalar_select 0, %s10, %s8
  $region1: #{discriminator_forward.1} parent=0
    #allocation2 [shape = 'u8[12288]{0}', space=vmem, size = 0x3000, scoped, tag = 'input window, operand 0, single buffered']
    #allocation3 [shape = 's32[1]{0}', space=sflag, size = 0x4, scoped, tag = 'scoped memory for discriminator_forward.1']
    #allocation4 [shape = 'u8[32768]{0}', space=vmem, size = 0x8000, scoped, tag = 'input window, operand 1, single buffered']
    #allocation5 [shape = 's32[1]{0}', space=sflag, size = 0x4, scoped, tag = 'scoped memory for discriminator_forward.1']
    #allocation6 [shape = 'u8[2048]{0}', space=vmem, size = 0x800, scoped, tag = 'input window, operand 2, single buffered']
    #allocation7 [shape = 'u8[262144]{0}', space=vmem, size = 0x40000, scoped, tag = 'input window, operand 3, single buffered']
    #allocation8 [shape = 's32[1]{0}', space=sflag, size = 0x4, scoped, tag = 'scoped memory for discriminator_forward.1']
    #allocation9 [shape = 'u8[65536]{0}', space=vmem, size = 0x10000, scoped, tag = 'input window, operand 5, single buffered']
    %12 = vsyncpa [#allocation3], 0
    %13 = vsyncpa [#allocation5], 0
    %14 = vsyncpa [#allocation8], 0
    // Predicated region
    $region2: #{discriminator_forward.1} parent=1 // pred_check
      _
    $region3: #{discriminator_forward.1} parent=1 // pred_check_branch
      %16 = sbr.rel (0) target = $region5
    $region4: #{discriminator_forward.1} parent=1 // pred_region
      %s18 = ssub.s32 384, 384
      %19 = vsyncadd [#allocation3], %s18
      %s20 = sshll.u32 [#allocation2], 4
      %s21 = int_to_ptr.vmem [resolvable:$true] %s20
      %26 = dma.hbm_to_vmem [thread:$0]  %s0, 384, %s21, [#allocation3], 128, 128, 8
    $region5: #{discriminator_forward.1} parent=1 // pred_fallthru
      _
    // Predicated region
    $region6: #{discriminator_forward.1} parent=1 // pred_check
      _
    $region7: #{discriminator_forward.1} parent=1 // pred_check_branch
      %28 = sbr.rel (0) target = $region9
    $region8: #{discriminator_forward.1} parent=1 // pred_region
      %s30 = ssub.s32 1024, 1024
      %31 = vsyncadd [#allocation5], %s30
      %s32 = sshll.u32 [#allocation4], 4
      %s33 = int_to_ptr.vmem [resolvable:$true] %s32
      %38 = dma.hbm_to_vmem [thread:$0]  %s1, 1024, %s33, [#allocation5], 256, 256, 16
    $region9: #{discriminator_forward.1} parent=1 // pred_fallthru
      _
    // Predicated region
    $region10: #{discriminator_forward.1} parent=1 // pred_check
      _
    $region11: #{discriminator_forward.1} parent=1 // pred_check_branch
      %40 = sbr.rel (0) target = $region13
    $region12: #{discriminator_forward.1} parent=1 // pred_region
      %s42 = ssub.s32 64, 64
      %43 = vsyncadd [#allocation5], %s42
      %s45 = sshll.u32 [#allocation6], 4
      %s46 = int_to_ptr.vmem [resolvable:$true] %s45
      %48 = dma.hbm_to_vmem [thread:$0]  %s2, 64, %s46, [#allocation5]
    $region13: #{discriminator_forward.1} parent=1 // pred_fallthru
      _
    // Predicated region
    $region14: #{discriminator_forward.1} parent=1 // pred_check
      _
    $region15: #{discriminator_forward.1} parent=1 // pred_check_branch
      %50 = sbr.rel (0) target = $region17
    $region16: #{discriminator_forward.1} parent=1 // pred_region
      %s52 = ssub.s32 8192, 8192
      %53 = vsyncadd [#allocation8], %s52
      %s54 = sshll.u32 [#allocation7], 4
      %s55 = int_to_ptr.vmem [resolvable:$true] %s54
      %60 = dma.hbm_to_vmem [thread:$0]  %s3, 8192, %s55, [#allocation8], 128, 128, 8
    $region17: #{discriminator_forward.1} parent=1 // pred_fallthru
      _
    // Predicated region
    $region18: #{discriminator_forward.1} parent=1 // pred_check
      _
    $region19: #{discriminator_forward.1} parent=1 // pred_check_branch
      %62 = sbr.rel (0) target = $region21
    $region20: #{discriminator_forward.1} parent=1 // pred_region
      _
    $region21: #{discriminator_forward.1} parent=1 // pred_fallthru
      _
    // Predicated region
    $region22: #{discriminator_forward.1} parent=1 // pred_check
      _
    $region23: #{discriminator_forward.1} parent=1 // pred_check_branch
      %64 = sbr.rel (0) target = $region25
    $region24: #{discriminator_forward.1} parent=1 // pred_region
      %s66 = ssub.s32 2048, 2048
      %67 = vsyncadd [#allocation8], %s66
      %s68 = sshll.u32 [#allocation9], 4
      %s69 = int_to_ptr.vmem [resolvable:$true] %s68
      %74 = dma.hbm_to_vmem [thread:$0]  %s5, 2048, %s69, [#allocation8], 64, 64, 4
    $region25: #{discriminator_forward.1} parent=1 // pred_fallthru
      _
    // Predicated region
    $region26: #{discriminator_forward.1} parent=1 // pred_check
      _
    $region27: #{discriminator_forward.1} parent=1 // pred_check_branch
      %76 = sbr.rel (0) target = $region29
    $region28: #{discriminator_forward.1} parent=1 // pred_region
      _
    $region29: #{discriminator_forward.1} parent=1 // pred_fallthru
      _
    // Predicated region
    $region30: #{discriminator_forward.1} parent=1 // pred_check
      _
    $region31: #{discriminator_forward.1} parent=1 // pred_check_branch
      %78 = sbr.rel (0) target = $region33
    $region32: #{discriminator_forward.1} parent=1 // pred_region
      %79 = dma.done [#allocation3], 384
    $region33: #{discriminator_forward.1} parent=1 // pred_fallthru
      _
    // Predicated region
    $region34: #{discriminator_forward.1} parent=1 // pred_check
      _
    $region35: #{discriminator_forward.1} parent=1 // pred_check_branch
      %81 = sbr.rel (0) target = $region37
    $region36: #{discriminator_forward.1} parent=1 // pred_region
      %82 = dma.done [#allocation5], 1024
    $region37: #{discriminator_forward.1} parent=1 // pred_fallthru
      _
    // Predicated region
    $region38: #{discriminator_forward.1} parent=1 // pred_check
      _
    $region39: #{discriminator_forward.1} parent=1 // pred_check_branch
      %84 = sbr.rel (0) target = $region41
    $region40: #{discriminator_forward.1} parent=1 // pred_region
      %85 = dma.done [#allocation5], 64
    $region41: #{discriminator_forward.1} parent=1 // pred_fallthru
      _
    // Predicated region
    $region42: #{discriminator_forward.1} parent=1 // pred_check
      _
    $region43: #{discriminator_forward.1} parent=1 // pred_check_branch
      %87 = sbr.rel (0) target = $region45
    $region44: #{discriminator_forward.1} parent=1 // pred_region
      %88 = dma.done [#allocation8], 8192
    $region45: #{discriminator_forward.1} parent=1 // pred_fallthru
      _
    // Predicated region
    $region46: #{discriminator_forward.1} parent=1 // pred_check
      _
    $region47: #{discriminator_forward.1} parent=1 // pred_check_branch
      %90 = sbr.rel (0) target = $region49
    $region48: #{discriminator_forward.1} parent=1 // pred_region
      %91 = dma.done [#allocation8], 2048
    $region49: #{discriminator_forward.1} parent=1 // pred_fallthru
      _
    %v93 = vld [vmem:[#allocation2] sm:$0xff]
    %v94 = vld [vmem:[#allocation2 + $0x8] sm:$0xff]
    %v95 = vld [vmem:[#allocation2 + $0x10] sm:$0xff]
    %v96 = vpack.c.bf16 %v94, %v93
    %v97 = vpack.c.bf16 %v95, %v95
    %v98 = vld [vmem:[#allocation4] sm:$0xff]
    %v99 = vld [vmem:[#allocation4 + $0x8] sm:$0xff]
    %v100 = vld [vmem:[#allocation4 + $0x10] sm:$0xff]
    %v101 = vld [vmem:[#allocation4 + $0x18] sm:$0xff]
    %v102 = vld [vmem:[#allocation4 + $0x20] sm:$0xff]
    %v103 = vld [vmem:[#allocation4 + $0x28] sm:$0xff]
    %v104 = vld [vmem:[#allocation4 + $0x30] sm:$0xff]
    %v105 = vld [vmem:[#allocation4 + $0x38] sm:$0xff]
    %v106 = vld [vmem:[#allocation6] sm:$0xf]
    %v108 = vlaneseq
    %v109 = vshrl.u32 %v108, 7
    %v110 = vsub.s32 0, %v109
    %v111 = vrot.slane %v106, %v110
    %v112 = vlaneseq
    %v113 = vshrl.u32 %v112, 7
    %v114 = vsub.s32 1, %v113
    %v115 = vrot.slane %v106, %v114
    %v116 = vlaneseq
    %v117 = vshrl.u32 %v116, 7
    %v118 = vsub.s32 2, %v117
    %v119 = vrot.slane %v106, %v118
    %v120 = vlaneseq
    %v121 = vshrl.u32 %v120, 7
    %v122 = vsub.s32 3, %v121
    %v123 = vrot.slane %v106, %v122
    %v136 = vunpack.c.l.b16 %v98
    %v137 = vunpack.c.h.b16 %v98
    %v138 = vunpack.c.l.b16 %v99
    %v139 = vunpack.c.h.b16 %v99
    %v140 = vunpack.c.l.b16 %v100
    %v141 = vunpack.c.h.b16 %v100
    %v142 = vunpack.c.l.b16 %v101
    %v143 = vunpack.c.h.b16 %v101
    %v144 = vunpack.c.l.b16 %v102
    %v145 = vunpack.c.h.b16 %v102
    %v146 = vunpack.c.l.b16 %v103
    %v147 = vunpack.c.h.b16 %v103
    %v148 = vunpack.c.l.b16 %v104
    %v149 = vunpack.c.h.b16 %v104
    %v150 = vunpack.c.l.b16 %v105
    %v151 = vunpack.c.h.b16 %v105
    %v152 = vpack.c.b16 %v140, %v136
    %v153 = vpack.c.b16 %v141, %v137
    %v154 = vpack.c.b16 %v142, %v138
    %v155 = vpack.c.b16 %v143, %v139
    %v156 = vpack.c.b16 %v148, %v144
    %v157 = vpack.c.b16 %v149, %v145
    %v158 = vpack.c.b16 %v150, %v146
    %v159 = vpack.c.b16 %v151, %v147
    %vm168 = vcmask 261120
    %v170 = vsel %vm168, %v96, 0
    %v173 = vsel %vm168, %v97, 0
    %175 = vmatprep.subr.bf16.mxu0 0
    %176 = vmatpush1.bf16.msra.mxu0 0
    %177 = vmatprep.subr.bf16.mxu0 0
    %178 = vmatpush1.bf16.msra.mxu0 0
    %179 = vmatprep.subr.bf16.mxu0 0
    %180 = vmatpush1.bf16.msra.mxu0 0
    %181 = vmatprep.subr.bf16.mxu0 0
    %182 = vmatpush1.bf16.msra.mxu0 0
    %183 = vmatprep.subr.bf16.mxu0 0
    %184 = vmatpush1.bf16.msra.mxu0 0
    %185 = vmatprep.subr.bf16.mxu0 0
    %186 = vmatpush1.bf16.msra.mxu0 0
    %187 = vmatprep.subr.bf16.mxu0 %v157
    %188 = vmatpush1.bf16.msra.mxu0 %v156
    %189 = vmatprep.subr.bf16.mxu0 %v153
    %190 = vmatpush1.bf16.msra.mxu0 %v152
    %191 = vmatprep.subr.bf16.mxu0 0
    %192 = vmatpush2.bf16.msra.mxu0 0
    %193 = vmatprep.subr.bf16.mxu0 0
    %194 = vmatpush2.bf16.msra.mxu0 0
    %195 = vmatprep.subr.bf16.mxu0 0
    %196 = vmatpush2.bf16.msra.mxu0 0
    %197 = vmatprep.subr.bf16.mxu0 0
    %198 = vmatpush2.bf16.msra.mxu0 0
    %199 = vmatprep.subr.bf16.mxu0 0
    %200 = vmatpush2.bf16.msra.mxu0 0
    %201 = vmatprep.subr.bf16.mxu0 0
    %202 = vmatpush2.bf16.msra.mxu0 0
    %203 = vmatprep.subr.bf16.mxu0 0
    %204 = vmatpush2.bf16.msra.mxu0 0
    %205 = vmatprep.subr.bf16.mxu0 0
    %206 = vmatpush2.bf16.msra.mxu0 0
    %207 = vmatprep.mubr.bf16.mxu0 0
    %208 = vmatmul.mubr.bf16.gmra.mxu0 %v170
    %v209 = vpop.f32.mrf.mxu0
    %v210 = vadd.f32 %v111, %v209
    %v211 = vpop.f32.mrf.mxu0
    %v212 = vadd.f32 %v115, %v211
    %v213 = vpop.f32.mrf.mxu0
    %v214 = vadd.f32 %v111, %v213
    %v215 = vpop.f32.mrf.mxu0
    %v216 = vadd.f32 %v115, %v215
    %217 = vmatprep.mubr.bf16.mxu0 0
    %218 = vmatmul.mubr.bf16.gmra.mxu0 %v173
    %v219 = vpop.f32.mrf.mxu0
    %v220 = vadd.f32 %v111, %v219
    %v221 = vpop.f32.mrf.mxu0
    %v222 = vadd.f32 %v115, %v221
    %v223 = vpop.f32.mrf.mxu0
    %v224 = vpop.f32.mrf.mxu0
    %225 = vdwg.mxu0
    %226 = vmatprep.subr.bf16.mxu0 0
    %227 = vmatpush1.bf16.msra.mxu0 0
    %228 = vmatprep.subr.bf16.mxu0 0
    %229 = vmatpush1.bf16.msra.mxu0 0
    %230 = vmatprep.subr.bf16.mxu0 0
    %231 = vmatpush1.bf16.msra.mxu0 0
    %232 = vmatprep.subr.bf16.mxu0 0
    %233 = vmatpush1.bf16.msra.mxu0 0
    %234 = vmatprep.subr.bf16.mxu0 0
    %235 = vmatpush1.bf16.msra.mxu0 0
    %236 = vmatprep.subr.bf16.mxu0 0
    %237 = vmatpush1.bf16.msra.mxu0 0
    %238 = vmatprep.subr.bf16.mxu0 %v159
    %239 = vmatpush1.bf16.msra.mxu0 %v158
    %240 = vmatprep.subr.bf16.mxu0 %v155
    %241 = vmatpush1.bf16.msra.mxu0 %v154
    %242 = vmatprep.subr.bf16.mxu0 0
    %243 = vmatpush2.bf16.msra.mxu0 0
    %244 = vmatprep.subr.bf16.mxu0 0
    %245 = vmatpush2.bf16.msra.mxu0 0
    %246 = vmatprep.subr.bf16.mxu0 0
    %247 = vmatpush2.bf16.msra.mxu0 0
    %248 = vmatprep.subr.bf16.mxu0 0
    %249 = vmatpush2.bf16.msra.mxu0 0
    %250 = vmatprep.subr.bf16.mxu0 0
    %251 = vmatpush2.bf16.msra.mxu0 0
    %252 = vmatprep.subr.bf16.mxu0 0
    %253 = vmatpush2.bf16.msra.mxu0 0
    %254 = vmatprep.subr.bf16.mxu0 0
    %255 = vmatpush2.bf16.msra.mxu0 0
    %256 = vmatprep.subr.bf16.mxu0 0
    %257 = vmatpush2.bf16.msra.mxu0 0
    %258 = vmatprep.mubr.bf16.mxu0 0
    %259 = vmatmul.mubr.bf16.gmra.mxu0 %v170
    %v260 = vpop.f32.mrf.mxu0
    %v261 = vadd.f32 %v119, %v260
    %v262 = vpop.f32.mrf.mxu0
    %v263 = vadd.f32 %v123, %v262
    %v264 = vpop.f32.mrf.mxu0
    %v265 = vadd.f32 %v119, %v264
    %v266 = vpop.f32.mrf.mxu0
    %v267 = vadd.f32 %v123, %v266
    %268 = vmatprep.mubr.bf16.mxu0 0
    %269 = vmatmul.mubr.bf16.gmra.mxu0 %v173
    %v270 = vpop.f32.mrf.mxu0
    %v271 = vadd.f32 %v119, %v270
    %v272 = vpop.f32.mrf.mxu0
    %v273 = vadd.f32 %v123, %v272
    %v274 = vpop.f32.mrf.mxu0
    %v275 = vpop.f32.mrf.mxu0
    %276 = vdwg.mxu0
    %v277 = vmax.f32 %v210, 0.0
    %v278 = vmax.f32 %v212, 0.0
    %v279 = vmax.f32 %v261, 0.0
    %v280 = vmax.f32 %v263, 0.0
    %v281 = vmax.f32 %v214, 0.0
    %v282 = vmax.f32 %v216, 0.0
    %v283 = vmax.f32 %v265, 0.0
    %v284 = vmax.f32 %v267, 0.0
    %v285 = vmax.f32 %v220, 0.0
    %v286 = vmax.f32 %v222, 0.0
    %v287 = vmax.f32 %v271, 0.0
    %v288 = vmax.f32 %v273, 0.0
    %v289 = vpack.c.bf16 %v281, %v277
    %v290 = vpack.c.bf16 %v282, %v278
    %v291 = vpack.c.bf16 %v283, %v279
    %v292 = vpack.c.bf16 %v284, %v280
    %v293 = vpack.c.bf16 %v285, %v285
    %v294 = vpack.c.bf16 %v286, %v286
    %v295 = vpack.c.bf16 %v287, %v287
    %v296 = vpack.c.bf16 %v288, %v288
    %v297 = vld [vmem:[#allocation7] sm:$0xff]
    %v298 = vld [vmem:[#allocation7 + $0x8] sm:$0xff]
    %v299 = vld [vmem:[#allocation7 + $0x10] sm:$0xff]
    %v300 = vld [vmem:[#allocation7 + $0x18] sm:$0xff]
    %v301 = vld [vmem:[#allocation7 + $0x20] sm:$0xff]
    %v302 = vld [vmem:[#allocation7 + $0x28] sm:$0xff]
    %v303 = vld [vmem:[#allocation7 + $0x30] sm:$0xff]
    %v304 = vld [vmem:[#allocation7 + $0x38] sm:$0xff]
    %v305 = vld [vmem:[#allocation7 + $0x40] sm:$0xff]
    %v306 = vld [vmem:[#allocation7 + $0x48] sm:$0xff]
    %v307 = vld [vmem:[#allocation7 + $0x50] sm:$0xff]
    %v308 = vld [vmem:[#allocation7 + $0x58] sm:$0xff]
    %v309 = vld [vmem:[#allocation7 + $0x60] sm:$0xff]
    %v310 = vld [vmem:[#allocation7 + $0x68] sm:$0xff]
    %v311 = vld [vmem:[#allocation7 + $0x70] sm:$0xff]
    %v312 = vld [vmem:[#allocation7 + $0x78] sm:$0xff]
    %v313 = vld [vmem:[#allocation7 + $0x80] sm:$0xff]
    %v314 = vld [vmem:[#allocation7 + $0x88] sm:$0xff]
    %v315 = vld [vmem:[#allocation7 + $0x90] sm:$0xff]
    %v316 = vld [vmem:[#allocation7 + $0x98] sm:$0xff]
    %v317 = vld [vmem:[#allocation7 + $0xa0] sm:$0xff]
    %v318 = vld [vmem:[#allocation7 + $0xa8] sm:$0xff]
    %v319 = vld [vmem:[#allocation7 + $0xb0] sm:$0xff]
    %v320 = vld [vmem:[#allocation7 + $0xb8] sm:$0xff]
    %v321 = vld [vmem:[#allocation7 + $0xc0] sm:$0xff]
    %v322 = vld [vmem:[#allocation7 + $0xc8] sm:$0xff]
    %v323 = vld [vmem:[#allocation7 + $0xd0] sm:$0xff]
    %v324 = vld [vmem:[#allocation7 + $0xd8] sm:$0xff]
    %v325 = vld [vmem:[#allocation7 + $0xe0] sm:$0xff]
    %v326 = vld [vmem:[#allocation7 + $0xe8] sm:$0xff]
    %v327 = vld [vmem:[#allocation7 + $0xf0] sm:$0xff]
    %v328 = vld [vmem:[#allocation7 + $0xf8] sm:$0xff]
    %v329 = vld [vmem:[#allocation7 + $0x100] sm:$0xff]
    %v330 = vld [vmem:[#allocation7 + $0x108] sm:$0xff]
    %v331 = vld [vmem:[#allocation7 + $0x110] sm:$0xff]
    %v332 = vld [vmem:[#allocation7 + $0x118] sm:$0xff]
    %v333 = vld [vmem:[#allocation7 + $0x120] sm:$0xff]
    %v334 = vld [vmem:[#allocation7 + $0x128] sm:$0xff]
    %v335 = vld [vmem:[#allocation7 + $0x130] sm:$0xff]
    %v336 = vld [vmem:[#allocation7 + $0x138] sm:$0xff]
    %v337 = vld [vmem:[#allocation7 + $0x140] sm:$0xff]
    %v338 = vld [vmem:[#allocation7 + $0x148] sm:$0xff]
    %v339 = vld [vmem:[#allocation7 + $0x150] sm:$0xff]
    %v340 = vld [vmem:[#allocation7 + $0x158] sm:$0xff]
    %v341 = vld [vmem:[#allocation7 + $0x160] sm:$0xff]
    %v342 = vld [vmem:[#allocation7 + $0x168] sm:$0xff]
    %v343 = vld [vmem:[#allocation7 + $0x170] sm:$0xff]
    %v344 = vld [vmem:[#allocation7 + $0x178] sm:$0xff]
    %v345 = vld [vmem:[#allocation7 + $0x180] sm:$0xff]
    %v346 = vld [vmem:[#allocation7 + $0x188] sm:$0xff]
    %v347 = vld [vmem:[#allocation7 + $0x190] sm:$0xff]
    %v348 = vld [vmem:[#allocation7 + $0x198] sm:$0xff]
    %v349 = vld [vmem:[#allocation7 + $0x1a0] sm:$0xff]
    %v350 = vld [vmem:[#allocation7 + $0x1a8] sm:$0xff]
    %v351 = vld [vmem:[#allocation7 + $0x1b0] sm:$0xff]
    %v352 = vld [vmem:[#allocation7 + $0x1b8] sm:$0xff]
    %v353 = vld [vmem:[#allocation7 + $0x1c0] sm:$0xff]
    %v354 = vld [vmem:[#allocation7 + $0x1c8] sm:$0xff]
    %v355 = vld [vmem:[#allocation7 + $0x1d0] sm:$0xff]
    %v356 = vld [vmem:[#allocation7 + $0x1d8] sm:$0xff]
    %v357 = vld [vmem:[#allocation7 + $0x1e0] sm:$0xff]
    %v358 = vld [vmem:[#allocation7 + $0x1e8] sm:$0xff]
    %v359 = vld [vmem:[#allocation7 + $0x1f0] sm:$0xff]
    %v360 = vld [vmem:[#allocation7 + $0x1f8] sm:$0xff]
    %v361 = vld [vmem:[%s4] sm:$0x3]
    %v363 = vlaneseq
    %v364 = vshrl.u32 %v363, 7
    %v365 = vsub.s32 0, %v364
    %v366 = vrot.slane %v361, %v365
    %v367 = vlaneseq
    %v368 = vshrl.u32 %v367, 7
    %v369 = vsub.s32 1, %v368
    %v370 = vrot.slane %v361, %v369
    %v437 = vunpack.c.l.b16 %v297
    %v438 = vunpack.c.h.b16 %v297
    %v439 = vunpack.c.l.b16 %v298
    %v440 = vunpack.c.h.b16 %v298
    %v441 = vunpack.c.l.b16 %v299
    %v442 = vunpack.c.h.b16 %v299
    %v443 = vunpack.c.l.b16 %v300
    %v444 = vunpack.c.h.b16 %v300
    %v445 = vunpack.c.l.b16 %v301
    %v446 = vunpack.c.h.b16 %v301
    %v447 = vunpack.c.l.b16 %v302
    %v448 = vunpack.c.h.b16 %v302
    %v449 = vunpack.c.l.b16 %v303
    %v450 = vunpack.c.h.b16 %v303
    %v451 = vunpack.c.l.b16 %v304
    %v452 = vunpack.c.h.b16 %v304
    %v453 = vunpack.c.l.b16 %v305
    %v454 = vunpack.c.h.b16 %v305
    %v455 = vunpack.c.l.b16 %v306
    %v456 = vunpack.c.h.b16 %v306
    %v457 = vunpack.c.l.b16 %v307
    %v458 = vunpack.c.h.b16 %v307
    %v459 = vunpack.c.l.b16 %v308
    %v460 = vunpack.c.h.b16 %v308
    %v461 = vunpack.c.l.b16 %v309
    %v462 = vunpack.c.h.b16 %v309
    %v463 = vunpack.c.l.b16 %v310
    %v464 = vunpack.c.h.b16 %v310
    %v465 = vunpack.c.l.b16 %v311
    %v466 = vunpack.c.h.b16 %v311
    %v467 = vunpack.c.l.b16 %v312
    %v468 = vunpack.c.h.b16 %v312
    %v469 = vunpack.c.l.b16 %v313
    %v470 = vunpack.c.h.b16 %v313
    %v471 = vunpack.c.l.b16 %v314
    %v472 = vunpack.c.h.b16 %v314
    %v473 = vunpack.c.l.b16 %v315
    %v474 = vunpack.c.h.b16 %v315
    %v475 = vunpack.c.l.b16 %v316
    %v476 = vunpack.c.h.b16 %v316
    %v477 = vunpack.c.l.b16 %v317
    %v478 = vunpack.c.h.b16 %v317
    %v479 = vunpack.c.l.b16 %v318
    %v480 = vunpack.c.h.b16 %v318
    %v481 = vunpack.c.l.b16 %v319
    %v482 = vunpack.c.h.b16 %v319
    %v483 = vunpack.c.l.b16 %v320
    %v484 = vunpack.c.h.b16 %v320
    %v485 = vunpack.c.l.b16 %v321
    %v486 = vunpack.c.h.b16 %v321
    %v487 = vunpack.c.l.b16 %v322
    %v488 = vunpack.c.h.b16 %v322
    %v489 = vunpack.c.l.b16 %v323
    %v490 = vunpack.c.h.b16 %v323
    %v491 = vunpack.c.l.b16 %v324
    %v492 = vunpack.c.h.b16 %v324
    %v493 = vunpack.c.l.b16 %v325
    %v494 = vunpack.c.h.b16 %v325
    %v495 = vunpack.c.l.b16 %v326
    %v496 = vunpack.c.h.b16 %v326
    %v497 = vunpack.c.l.b16 %v327
    %v498 = vunpack.c.h.b16 %v327
    %v499 = vunpack.c.l.b16 %v328
    %v500 = vunpack.c.h.b16 %v328
    %v501 = vunpack.c.l.b16 %v329
    %v502 = vunpack.c.h.b16 %v329
    %v503 = vunpack.c.l.b16 %v330
    %v504 = vunpack.c.h.b16 %v330
    %v505 = vunpack.c.l.b16 %v331
    %v506 = vunpack.c.h.b16 %v331
    %v507 = vunpack.c.l.b16 %v332
    %v508 = vunpack.c.h.b16 %v332
    %v509 = vunpack.c.l.b16 %v333
    %v510 = vunpack.c.h.b16 %v333
    %v511 = vunpack.c.l.b16 %v334
    %v512 = vunpack.c.h.b16 %v334
    %v513 = vunpack.c.l.b16 %v335
    %v514 = vunpack.c.h.b16 %v335
    %v515 = vunpack.c.l.b16 %v336
    %v516 = vunpack.c.h.b16 %v336
    %v517 = vunpack.c.l.b16 %v337
    %v518 = vunpack.c.h.b16 %v337
    %v519 = vunpack.c.l.b16 %v338
    %v520 = vunpack.c.h.b16 %v338
    %v521 = vunpack.c.l.b16 %v339
    %v522 = vunpack.c.h.b16 %v339
    %v523 = vunpack.c.l.b16 %v340
    %v524 = vunpack.c.h.b16 %v340
    %v525 = vunpack.c.l.b16 %v341
    %v526 = vunpack.c.h.b16 %v341
    %v527 = vunpack.c.l.b16 %v342
    %v528 = vunpack.c.h.b16 %v342
    %v529 = vunpack.c.l.b16 %v343
    %v530 = vunpack.c.h.b16 %v343
    %v531 = vunpack.c.l.b16 %v344
    %v532 = vunpack.c.h.b16 %v344
    %v533 = vunpack.c.l.b16 %v345
    %v534 = vunpack.c.h.b16 %v345
    %v535 = vunpack.c.l.b16 %v346
    %v536 = vunpack.c.h.b16 %v346
    %v537 = vunpack.c.l.b16 %v347
    %v538 = vunpack.c.h.b16 %v347
    %v539 = vunpack.c.l.b16 %v348
    %v540 = vunpack.c.h.b16 %v348
    %v541 = vunpack.c.l.b16 %v349
    %v542 = vunpack.c.h.b16 %v349
    %v543 = vunpack.c.l.b16 %v350
    %v544 = vunpack.c.h.b16 %v350
    %v545 = vunpack.c.l.b16 %v351
    %v546 = vunpack.c.h.b16 %v351
    %v547 = vunpack.c.l.b16 %v352
    %v548 = vunpack.c.h.b16 %v352
    %v549 = vunpack.c.l.b16 %v353
    %v550 = vunpack.c.h.b16 %v353
    %v551 = vunpack.c.l.b16 %v354
    %v552 = vunpack.c.h.b16 %v354
    %v553 = vunpack.c.l.b16 %v355
    %v554 = vunpack.c.h.b16 %v355
    %v555 = vunpack.c.l.b16 %v356
    %v556 = vunpack.c.h.b16 %v356
    %v557 = vunpack.c.l.b16 %v357
    %v558 = vunpack.c.h.b16 %v357
    %v559 = vunpack.c.l.b16 %v358
    %v560 = vunpack.c.h.b16 %v358
    %v561 = vunpack.c.l.b16 %v359
    %v562 = vunpack.c.h.b16 %v359
    %v563 = vunpack.c.l.b16 %v360
    %v564 = vunpack.c.h.b16 %v360
    %v565 = vpack.c.b16 %v439, %v437
    %v566 = vpack.c.b16 %v440, %v438
    %v567 = vpack.c.b16 %v443, %v441
    %v568 = vpack.c.b16 %v444, %v442
    %v569 = vpack.c.b16 %v447, %v445
    %v570 = vpack.c.b16 %v448, %v446
    %v571 = vpack.c.b16 %v451, %v449
    %v572 = vpack.c.b16 %v452, %v450
    %v573 = vpack.c.b16 %v455, %v453
    %v574 = vpack.c.b16 %v456, %v454
    %v575 = vpack.c.b16 %v459, %v457
    %v576 = vpack.c.b16 %v460, %v458
    %v577 = vpack.c.b16 %v463, %v461
    %v578 = vpack.c.b16 %v464, %v462
    %v579 = vpack.c.b16 %v467, %v465
    %v580 = vpack.c.b16 %v468, %v466
    %v581 = vpack.c.b16 %v471, %v469
    %v582 = vpack.c.b16 %v472, %v470
    %v583 = vpack.c.b16 %v475, %v473
    %v584 = vpack.c.b16 %v476, %v474
    %v585 = vpack.c.b16 %v479, %v477
    %v586 = vpack.c.b16 %v480, %v478
    %v587 = vpack.c.b16 %v483, %v481
    %v588 = vpack.c.b16 %v484, %v482
    %v589 = vpack.c.b16 %v487, %v485
    %v590 = vpack.c.b16 %v488, %v486
    %v591 = vpack.c.b16 %v491, %v489
    %v592 = vpack.c.b16 %v492, %v490
    %v593 = vpack.c.b16 %v495, %v493
    %v594 = vpack.c.b16 %v496, %v494
    %v595 = vpack.c.b16 %v499, %v497
    %v596 = vpack.c.b16 %v500, %v498
    %v597 = vpack.c.b16 %v503, %v501
    %v598 = vpack.c.b16 %v504, %v502
    %v599 = vpack.c.b16 %v507, %v505
    %v600 = vpack.c.b16 %v508, %v506
    %v601 = vpack.c.b16 %v511, %v509
    %v602 = vpack.c.b16 %v512, %v510
    %v603 = vpack.c.b16 %v515, %v513
    %v604 = vpack.c.b16 %v516, %v514
    %v605 = vpack.c.b16 %v519, %v517
    %v606 = vpack.c.b16 %v520, %v518
    %v607 = vpack.c.b16 %v523, %v521
    %v608 = vpack.c.b16 %v524, %v522
    %v609 = vpack.c.b16 %v527, %v525
    %v610 = vpack.c.b16 %v528, %v526
    %v611 = vpack.c.b16 %v531, %v529
    %v612 = vpack.c.b16 %v532, %v530
    %v613 = vpack.c.b16 %v535, %v533
    %v614 = vpack.c.b16 %v536, %v534
    %v615 = vpack.c.b16 %v539, %v537
    %v616 = vpack.c.b16 %v540, %v538
    %v617 = vpack.c.b16 %v543, %v541
    %v618 = vpack.c.b16 %v544, %v542
    %v619 = vpack.c.b16 %v547, %v545
    %v620 = vpack.c.b16 %v548, %v546
    %v621 = vpack.c.b16 %v551, %v549
    %v622 = vpack.c.b16 %v552, %v550
    %v623 = vpack.c.b16 %v555, %v553
    %v624 = vpack.c.b16 %v556, %v554
    %v625 = vpack.c.b16 %v559, %v557
    %v626 = vpack.c.b16 %v560, %v558
    %v627 = vpack.c.b16 %v563, %v561
    %v628 = vpack.c.b16 %v564, %v562
    %693 = vmatprep.subr.bf16.mxu0 %v580
    %694 = vmatpush1.bf16.msra.mxu0 %v579
    %695 = vmatprep.subr.bf16.mxu0 %v578
    %696 = vmatpush1.bf16.msra.mxu0 %v577
    %697 = vmatprep.subr.bf16.mxu0 %v576
    %698 = vmatpush1.bf16.msra.mxu0 %v575
    %699 = vmatprep.subr.bf16.mxu0 %v574
    %700 = vmatpush1.bf16.msra.mxu0 %v573
    %701 = vmatprep.subr.bf16.mxu0 %v572
    %702 = vmatpush1.bf16.msra.mxu0 %v571
    %703 = vmatprep.subr.bf16.mxu0 %v570
    %704 = vmatpush1.bf16.msra.mxu0 %v569
    %705 = vmatprep.subr.bf16.mxu0 %v568
    %706 = vmatpush1.bf16.msra.mxu0 %v567
    %707 = vmatprep.subr.bf16.mxu0 %v566
    %708 = vmatpush1.bf16.msra.mxu0 %v565
    %709 = vmatprep.subr.bf16.mxu0 %v596
    %710 = vmatpush2.bf16.msra.mxu0 %v595
    %711 = vmatprep.subr.bf16.mxu0 %v594
    %712 = vmatpush2.bf16.msra.mxu0 %v593
    %713 = vmatprep.subr.bf16.mxu0 %v592
    %714 = vmatpush2.bf16.msra.mxu0 %v591
    %715 = vmatprep.subr.bf16.mxu0 %v590
    %716 = vmatpush2.bf16.msra.mxu0 %v589
    %717 = vmatprep.subr.bf16.mxu0 %v588
    %718 = vmatpush2.bf16.msra.mxu0 %v587
    %719 = vmatprep.subr.bf16.mxu0 %v586
    %720 = vmatpush2.bf16.msra.mxu0 %v585
    %721 = vmatprep.subr.bf16.mxu0 %v584
    %722 = vmatpush2.bf16.msra.mxu0 %v583
    %723 = vmatprep.subr.bf16.mxu0 %v582
    %724 = vmatpush2.bf16.msra.mxu0 %v581
    %725 = vmatprep.mubr.bf16.mxu0 %v290
    %726 = vmatmul.mubr.bf16.gmra.mxu0 %v289
    %v727 = vpop.f32.mrf.mxu0
    %v728 = vadd.f32 %v366, %v727
    %v729 = vpop.f32.mrf.mxu0
    %v730 = vadd.f32 %v370, %v729
    %v731 = vpop.f32.mrf.mxu0
    %v732 = vadd.f32 %v366, %v731
    %v733 = vpop.f32.mrf.mxu0
    %v734 = vadd.f32 %v370, %v733
    %735 = vmatprep.mubr.bf16.mxu0 %v294
    %736 = vmatmul.mubr.bf16.gmra.mxu0 %v293
    %v737 = vpop.f32.mrf.mxu0
    %v738 = vadd.f32 %v366, %v737
    %v739 = vpop.f32.mrf.mxu0
    %v740 = vadd.f32 %v370, %v739
    %v741 = vpop.f32.mrf.mxu0
    %v742 = vpop.f32.mrf.mxu0
    %743 = vdwg.mxu0
    %744 = vmatprep.subr.bf16.mxu0 %v612
    %745 = vmatpush1.bf16.msra.mxu0 %v611
    %746 = vmatprep.subr.bf16.mxu0 %v610
    %747 = vmatpush1.bf16.msra.mxu0 %v609
    %748 = vmatprep.subr.bf16.mxu0 %v608
    %749 = vmatpush1.bf16.msra.mxu0 %v607
    %750 = vmatprep.subr.bf16.mxu0 %v606
    %751 = vmatpush1.bf16.msra.mxu0 %v605
    %752 = vmatprep.subr.bf16.mxu0 %v604
    %753 = vmatpush1.bf16.msra.mxu0 %v603
    %754 = vmatprep.subr.bf16.mxu0 %v602
    %755 = vmatpush1.bf16.msra.mxu0 %v601
    %756 = vmatprep.subr.bf16.mxu0 %v600
    %757 = vmatpush1.bf16.msra.mxu0 %v599
    %758 = vmatprep.subr.bf16.mxu0 %v598
    %759 = vmatpush1.bf16.msra.mxu0 %v597
    %760 = vmatprep.subr.bf16.mxu0 %v628
    %761 = vmatpush2.bf16.msra.mxu0 %v627
    %762 = vmatprep.subr.bf16.mxu0 %v626
    %763 = vmatpush2.bf16.msra.mxu0 %v625
    %764 = vmatprep.subr.bf16.mxu0 %v624
    %765 = vmatpush2.bf16.msra.mxu0 %v623
    %766 = vmatprep.subr.bf16.mxu0 %v622
    %767 = vmatpush2.bf16.msra.mxu0 %v621
    %768 = vmatprep.subr.bf16.mxu0 %v620
    %769 = vmatpush2.bf16.msra.mxu0 %v619
    %770 = vmatprep.subr.bf16.mxu0 %v618
    %771 = vmatpush2.bf16.msra.mxu0 %v617
    %772 = vmatprep.subr.bf16.mxu0 %v616
    %773 = vmatpush2.bf16.msra.mxu0 %v615
    %774 = vmatprep.subr.bf16.mxu0 %v614
    %775 = vmatpush2.bf16.msra.mxu0 %v613
    %776 = vmatprep.mubr.bf16.mxu0 %v292
    %777 = vmatmul.mubr.bf16.gmra.mxu0 %v291
    %v778 = vpop.f32.mrf.mxu0
    %v779 = vadd.f32 %v728, %v778
    %v780 = vpop.f32.mrf.mxu0
    %v781 = vadd.f32 %v730, %v780
    %v782 = vpop.f32.mrf.mxu0
    %v783 = vadd.f32 %v732, %v782
    %v784 = vpop.f32.mrf.mxu0
    %v785 = vadd.f32 %v734, %v784
    %786 = vmatprep.mubr.bf16.mxu0 %v296
    %787 = vmatmul.mubr.bf16.gmra.mxu0 %v295
    %v788 = vpop.f32.mrf.mxu0
    %v789 = vadd.f32 %v738, %v788
    %v790 = vpop.f32.mrf.mxu0
    %v791 = vadd.f32 %v740, %v790
    %v792 = vpop.f32.mrf.mxu0
    %v793 = vpop.f32.mrf.mxu0
    %794 = vdwg.mxu0
    %v795 = vmax.f32 %v779, 0.0
    %v796 = vmax.f32 %v781, 0.0
    %v797 = vmax.f32 %v783, 0.0
    %v798 = vmax.f32 %v785, 0.0
    %v799 = vmax.f32 %v789, 0.0
    %v800 = vmax.f32 %v791, 0.0
    %v801 = vpack.c.bf16 %v797, %v795
    %v802 = vpack.c.bf16 %v798, %v796
    %v803 = vpack.c.bf16 %v799, %v799
    %v804 = vpack.c.bf16 %v800, %v800
    %v805 = vld [vmem:[#allocation9] sm:$0xf]
    %v806 = vld [vmem:[#allocation9 + $0x4] sm:$0xf]
    %v807 = vld [vmem:[#allocation9 + $0x8] sm:$0xf]
    %v808 = vld [vmem:[#allocation9 + $0xc] sm:$0xf]
    %v809 = vld [vmem:[#allocation9 + $0x10] sm:$0xf]
    %v810 = vld [vmem:[#allocation9 + $0x14] sm:$0xf]
    %v811 = vld [vmem:[#allocation9 + $0x18] sm:$0xf]
    %v812 = vld [vmem:[#allocation9 + $0x1c] sm:$0xf]
    %v813 = vld [vmem:[#allocation9 + $0x20] sm:$0xf]
    %v814 = vld [vmem:[#allocation9 + $0x24] sm:$0xf]
    %v815 = vld [vmem:[#allocation9 + $0x28] sm:$0xf]
    %v816 = vld [vmem:[#allocation9 + $0x2c] sm:$0xf]
    %v817 = vld [vmem:[#allocation9 + $0x30] sm:$0xf]
    %v818 = vld [vmem:[#allocation9 + $0x34] sm:$0xf]
    %v819 = vld [vmem:[#allocation9 + $0x38] sm:$0xf]
    %v820 = vld [vmem:[#allocation9 + $0x3c] sm:$0xf]
    %v821 = vld [vmem:[#allocation9 + $0x40] sm:$0xf]
    %v822 = vld [vmem:[#allocation9 + $0x44] sm:$0xf]
    %v823 = vld [vmem:[#allocation9 + $0x48] sm:$0xf]
    %v824 = vld [vmem:[#allocation9 + $0x4c] sm:$0xf]
    %v825 = vld [vmem:[#allocation9 + $0x50] sm:$0xf]
    %v826 = vld [vmem:[#allocation9 + $0x54] sm:$0xf]
    %v827 = vld [vmem:[#allocation9 + $0x58] sm:$0xf]
    %v828 = vld [vmem:[#allocation9 + $0x5c] sm:$0xf]
    %v829 = vld [vmem:[#allocation9 + $0x60] sm:$0xf]
    %v830 = vld [vmem:[#allocation9 + $0x64] sm:$0xf]
    %v831 = vld [vmem:[#allocation9 + $0x68] sm:$0xf]
    %v832 = vld [vmem:[#allocation9 + $0x6c] sm:$0xf]
    %v833 = vld [vmem:[#allocation9 + $0x70] sm:$0xf]
    %v834 = vld [vmem:[#allocation9 + $0x74] sm:$0xf]
    %v835 = vld [vmem:[#allocation9 + $0x78] sm:$0xf]
    %v836 = vld [vmem:[#allocation9 + $0x7c] sm:$0xf]
    %v837 = vld [vmem:[%s6] sm:$0x1]
    %v839 = vlaneseq
    %v840 = vshrl.u32 %v839, 7
    %v841 = vsub.s32 0, %v840
    %v842 = vrot.slane %v837, %v841
    %v876 = vunpack.c.l.b16 %v805
    %v877 = vunpack.c.l.b16 %v806
    %v878 = vunpack.c.l.b16 %v807
    %v879 = vunpack.c.l.b16 %v808
    %v880 = vunpack.c.l.b16 %v809
    %v881 = vunpack.c.l.b16 %v810
    %v882 = vunpack.c.l.b16 %v811
    %v883 = vunpack.c.l.b16 %v812
    %v884 = vunpack.c.l.b16 %v813
    %v885 = vunpack.c.l.b16 %v814
    %v886 = vunpack.c.l.b16 %v815
    %v887 = vunpack.c.l.b16 %v816
    %v888 = vunpack.c.l.b16 %v817
    %v889 = vunpack.c.l.b16 %v818
    %v890 = vunpack.c.l.b16 %v819
    %v891 = vunpack.c.l.b16 %v820
    %v892 = vunpack.c.l.b16 %v821
    %v893 = vunpack.c.l.b16 %v822
    %v894 = vunpack.c.l.b16 %v823
    %v895 = vunpack.c.l.b16 %v824
    %v896 = vunpack.c.l.b16 %v825
    %v897 = vunpack.c.l.b16 %v826
    %v898 = vunpack.c.l.b16 %v827
    %v899 = vunpack.c.l.b16 %v828
    %v900 = vunpack.c.l.b16 %v829
    %v901 = vunpack.c.l.b16 %v830
    %v902 = vunpack.c.l.b16 %v831
    %v903 = vunpack.c.l.b16 %v832
    %v904 = vunpack.c.l.b16 %v833
    %v905 = vunpack.c.l.b16 %v834
    %v906 = vunpack.c.l.b16 %v835
    %v907 = vunpack.c.l.b16 %v836
    %v908 = vpack.c.b16 %v877, %v876
    %v909 = vpack.c.b16 %v879, %v878
    %v910 = vpack.c.b16 %v881, %v880
    %v911 = vpack.c.b16 %v883, %v882
    %v912 = vpack.c.b16 %v885, %v884
    %v913 = vpack.c.b16 %v887, %v886
    %v914 = vpack.c.b16 %v889, %v888
    %v915 = vpack.c.b16 %v891, %v890
    %v916 = vpack.c.b16 %v893, %v892
    %v917 = vpack.c.b16 %v895, %v894
    %v918 = vpack.c.b16 %v897, %v896
    %v919 = vpack.c.b16 %v899, %v898
    %v920 = vpack.c.b16 %v901, %v900
    %v921 = vpack.c.b16 %v903, %v902
    %v922 = vpack.c.b16 %v905, %v904
    %v923 = vpack.c.b16 %v907, %v906
    %940 = vmatprep.subr.bf16.mxu0 0
    %941 = vmatpush1.bf16.msra.mxu0 %v915
    %942 = vmatprep.subr.bf16.mxu0 0
    %943 = vmatpush1.bf16.msra.mxu0 %v914
    %944 = vmatprep.subr.bf16.mxu0 0
    %945 = vmatpush1.bf16.msra.mxu0 %v913
    %946 = vmatprep.subr.bf16.mxu0 0
    %947 = vmatpush1.bf16.msra.mxu0 %v912
    %948 = vmatprep.subr.bf16.mxu0 0
    %949 = vmatpush1.bf16.msra.mxu0 %v911
    %950 = vmatprep.subr.bf16.mxu0 0
    %951 = vmatpush1.bf16.msra.mxu0 %v910
    %952 = vmatprep.subr.bf16.mxu0 0
    %953 = vmatpush1.bf16.msra.mxu0 %v909
    %954 = vmatprep.subr.bf16.mxu0 0
    %955 = vmatpush1.bf16.msra.mxu0 %v908
    %956 = vmatprep.subr.bf16.mxu0 0
    %957 = vmatpush2.bf16.msra.mxu0 %v923
    %958 = vmatprep.subr.bf16.mxu0 0
    %959 = vmatpush2.bf16.msra.mxu0 %v922
    %960 = vmatprep.subr.bf16.mxu0 0
    %961 = vmatpush2.bf16.msra.mxu0 %v921
    %962 = vmatprep.subr.bf16.mxu0 0
    %963 = vmatpush2.bf16.msra.mxu0 %v920
    %964 = vmatprep.subr.bf16.mxu0 0
    %965 = vmatpush2.bf16.msra.mxu0 %v919
    %966 = vmatprep.subr.bf16.mxu0 0
    %967 = vmatpush2.bf16.msra.mxu0 %v918
    %968 = vmatprep.subr.bf16.mxu0 0
    %969 = vmatpush2.bf16.msra.mxu0 %v917
    %970 = vmatprep.subr.bf16.mxu0 0
    %971 = vmatpush2.bf16.msra.mxu0 %v916
    %972 = vmatprep.mubr.bf16.mxu0 %v802
    %973 = vmatmul.mubr.bf16.gmra.mxu0 %v801
    %v974 = vpop.f32.mrf.mxu0
    %v975 = vadd.f32 %v842, %v974
    %v976 = vpop.f32.mrf.mxu0
    %v977 = vpop.f32.mrf.mxu0
    %v978 = vadd.f32 %v842, %v977
    %v979 = vpop.f32.mrf.mxu0
    %980 = vmatprep.mubr.bf16.mxu0 %v804
    %981 = vmatmul.mubr.bf16.gmra.mxu0 %v803
    %v982 = vpop.f32.mrf.mxu0
    %v983 = vadd.f32 %v842, %v982
    %v984 = vpop.f32.mrf.mxu0
    %v985 = vpop.f32.mrf.mxu0
    %v986 = vpop.f32.mrf.mxu0
    %987 = vdwg.mxu0
    %vm988 = vcmask 7168
    %989 = vst.msk [vmem:[%s7] sm:$0xff] %vm988, %v975
    %990 = vst.msk [vmem:[%s7 + $0x8] sm:$0xff] %vm988, %v978
    %991 = vst.msk [vmem:[%s7 + $0x10] sm:$0xff] %vm988, %v983
    // Predicated region
    $region50: #{discriminator_forward.1} parent=1 // pred_check
      _
    $region51: #{discriminator_forward.1} parent=1 // pred_check_branch
      %993 = sbr.rel (0) target = $region53
    $region52: #{discriminator_forward.1} parent=1 // pred_region
      _
    $region53: #{discriminator_forward.1} parent=1 // pred_fallthru
      _
    // Predicated region
    $region54: #{discriminator_forward.1} parent=1 // pred_check
      _
    $region55: #{discriminator_forward.1} parent=1 // pred_check_branch
      %995 = sbr.rel (0) target = $region57
    $region56: #{discriminator_forward.1} parent=1 // pred_region
      _
    $region57: #{discriminator_forward.1} parent=1 // pred_fallthru
      _
    %996 = vsyncpa [#allocation3], 1
    %997 = vsyncpa [#allocation5], 1
    %998 = vsyncpa [#allocation8], 1

</llo_original>
